<compile_context>
chip_gen: v6e
topology: v6e:2x2x1
jax: 0.10.0
libtpu: 0.0.40
codegen_flags: <defaults>
</compile_context>

<pallas_src>
import jax
import jax.numpy as jnp
import numpy as np
from jax.experimental import pallas as pl
from jax.experimental.pallas import tpu as pltpu


def _round_up(x, m):
    return (x + m - 1) // m * m


# ---------------------------------------------------------------------------
# Kernel 1: shared features (h-conv, v-conv) + fc1  ->  z[B_pad, E]
# ---------------------------------------------------------------------------
def caser_features_kernel(x_ref, w3_ref, bh1_ref, bh2_ref, wvx_ref, bvx_ref,
                          w1h1_ref, w1h2_ref, w1v_ref, fc1b_ref, z_ref):
    x = x_ref[...]                                       # [TB, L, E] f32
    TB, L, E = x.shape
    Fh = bh1_ref.shape[1]
    cdt = w3_ref.dtype                                   # MXU operand dtype (f32 or bf16)

    # --- fused horizontal convolutions (window sizes 1 and 2) ---
    # Single MXU matmul for all three weight blocks: [TB*L, E] x [E, 3*Fh], f32 accumulation.
    S = jnp.dot(x.reshape(TB * L, E).astype(cdt), w3_ref[...],
                preferred_element_type=jnp.float32).reshape(TB, L, 3 * Fh)
    s1 = S[:, :, :Fh] + bh1_ref[...]                     # [TB, L, Fh]
    h1 = jnp.max(jnp.maximum(s1, 0.0), axis=1)           # [TB, Fh]
    s2 = S[:, :L - 1, Fh:2 * Fh] + S[:, 1:, 2 * Fh:] + bh2_ref[...]   # [TB, L-1, Fh]
    h2 = jnp.max(jnp.maximum(s2, 0.0), axis=1)           # [TB, Fh]

    # --- vertical convolution (Conv2d kernel (L, 1)) as ONE MXU matmul ---
    # wvx is the block-diagonal expansion [L*E, Fv*E] built in the wrapper, so
    # v_flat[b, f*E + e] = relu(sum_l wv[f, l] * x[b, l, e] + bv[f])  (f-major == torch reshape).
    v = jnp.dot(x.reshape(TB, L * E).astype(cdt), wvx_ref[...],
                preferred_element_type=jnp.float32) + bvx_ref[...]
    v = jnp.maximum(v, 0.0)                              # [TB, Fv*E]

    # --- fc1 over concat([h1, h2, v_flat]) == sum of three matmuls (no concat/scratch) ---
    z = (jnp.dot(h1.astype(cdt), w1h1_ref[...], preferred_element_type=jnp.float32)
         + jnp.dot(h2.astype(cdt), w1h2_ref[...], preferred_element_type=jnp.float32)
         + jnp.dot(v.astype(cdt), w1v_ref[...], preferred_element_type=jnp.float32)
         + fc1b_ref[...])
    # dropout = identity in eval mode
    z_ref[...] = jnp.maximum(z, 0.0).astype(z_ref.dtype)


# ---------------------------------------------------------------------------
# Kernel 2: fc2 GEMM  out[TB, TN] = z[TB, E] @ fc2_w^T[E, TN] + fc2_b[TN]
# Grid = (item tiles [slow], batch tiles [fast]) so each fc2 weight tile is DMA'd once.
# ---------------------------------------------------------------------------
def caser_fc2_kernel(z_ref, w_ref, b_ref, out_ref):
    out = jnp.dot(z_ref[...].astype(w_ref.dtype), w_ref[...],
                  preferred_element_type=jnp.float32) + b_ref[...]
    out_ref[...] = out.astype(out_ref.dtype)


def init_params(key, num_items, embedding_dim, max_seq_len, num_h_filters, num_v_filters):
    ks = jax.random.split(key, 10)
    s = 0.1
    emb = s * jax.random.normal(ks[0], (num_items + 1, embedding_dim), jnp.float32)
    emb = emb.at[0].set(0.0)                                       # padding_idx=0
    # HorizontalConvolution: Conv2d(1, Fh, (1, E)) and Conv2d(1, Fh, (2, E))
    wh1 = s * jax.random.normal(ks[1], (num_h_filters, 1, 1, embedding_dim), jnp.float32)
    bh1 = s * jax.random.normal(ks[2], (num_h_filters,), jnp.float32)
    wh2 = s * jax.random.normal(ks[3], (num_h_filters, 1, 2, embedding_dim), jnp.float32)
    bh2 = s * jax.random.normal(ks[4], (num_h_filters,), jnp.float32)
    # VerticalConvolution: Conv2d(1, Fv, (L, 1))
    wv = s * jax.random.normal(ks[5], (num_v_filters, 1, max_seq_len, 1), jnp.float32)
    bv = s * jax.random.normal(ks[6], (num_v_filters,), jnp.float32)
    # fc layers
    fc_dim = num_h_filters * 2 + num_v_filters * embedding_dim
    fc1_w = s * jax.random.normal(ks[7], (embedding_dim, fc_dim), jnp.float32)
    fc1_b = s * jax.random.normal(ks[8], (embedding_dim,), jnp.float32)
    k9, k10 = jax.random.split(ks[9])
    fc2_w = s * jax.random.normal(k9, (num_items, embedding_dim), jnp.float32)
    fc2_b = s * jax.random.normal(k10, (num_items,), jnp.float32)
    return dict(emb=emb, wh1=wh1, bh1=bh1, wh2=wh2, bh2=bh2, wv=wv, bv=bv,
                fc1_w=fc1_w, fc1_b=fc1_b, fc2_w=fc2_w, fc2_b=fc2_b)


def caser_forward(seq, params, *, num_items, embedding_dim, max_seq_len,
                  num_h_filters, num_v_filters,
                  compute_dtype=jnp.float32, out_dtype=jnp.float32,
                  batch_tile=256, item_tile=2048):
    B, L = seq.shape
    E, Fh, Fv, N = embedding_dim, num_h_filters, num_v_filters, num_items
    assert L == max_seq_len
    assert L >= 2, "window-2 horizontal conv requires max_seq_len >= 2"

    # ---- tile sizing / padding (lane-dense output, multiple-of-8 batch tiles) ----
    TB = _round_up(min(batch_tile, _round_up(B, 8)), 8)
    B_pad = _round_up(B, TB)
    TN = item_tile if N > item_tile else _round_up(N, 128)
    TN = _round_up(TN, 128)
    N_pad = _round_up(N, TN)
    nb, nj = B_pad // TB, N_pad // TN
    fc_dim = 2 * Fh + Fv * E
    assert params['fc1_w'].shape == (E, fc_dim)
    cd_size = jnp.dtype(compute_dtype).itemsize
    out_size = jnp.dtype(out_dtype).itemsize

    # ---- glue: embedding gather + parameter reshuffling / padding (free XLA ops) ----
    seq_p = jnp.pad(seq, ((0, B_pad - B), (0, 0)))                      # padded rows -> index 0
    x = jnp.take(params['emb'], seq_p, axis=0).astype(jnp.float32)      # [B_pad, L, E] f32

    # fused horizontal-conv weight [E, 3*Fh] = [wh1 | wh2(row 0) | wh2(row 1)]
    w3 = jnp.concatenate([params['wh1'][:, 0, 0, :].T,
                          params['wh2'][:, 0, 0, :].T,
                          params['wh2'][:, 0, 1, :].T], axis=1).astype(compute_dtype)
    bh1 = params['bh1'].reshape(1, Fh).astype(jnp.float32)
    bh2 = params['bh2'].reshape(1, Fh).astype(jnp.float32)

    # vertical-conv weight expanded to a block-diagonal [L*E, Fv*E] matrix for one MXU matmul
    wv_fl = params['wv'][:, 0, :, 0]                                    # [Fv, L]
    eye_e = jnp.eye(E, dtype=jnp.float32)
    wvx = jnp.einsum('fl,ij->lifj', wv_fl, eye_e).reshape(L * E, Fv * E).astype(compute_dtype)
    bvx = jnp.repeat(params['bv'], E).reshape(1, Fv * E).astype(jnp.float32)

    # fc1 weight split into the row-blocks matching concat([h1, h2, v_flat])
    fc1_wt = params['fc1_w'].T                                          # [fc_dim, E]
    w1h1 = fc1_wt[:Fh].astype(compute_dtype)                            # [Fh, E]
    w1h2 = fc1_wt[Fh:2 * Fh].astype(compute_dtype)                      # [Fh, E]
    w1v = fc1_wt[2 * Fh:].astype(compute_dtype)                         # [Fv*E, E]
    fc1b = params['fc1_b'].reshape(1, E).astype(jnp.float32)

    fc2wt = jnp.pad(params['fc2_w'].T, ((0, 0), (0, N_pad - N))).astype(compute_dtype)  # [E, N_pad]
    fc2b = jnp.pad(params['fc2_b'], (0, N_pad - N)).reshape(1, N_pad).astype(jnp.float32)

    const2 = lambda i: (0, 0)

    # -------------------- pallas_call 1: features + fc1 -> z[B_pad, E] --------------------
    feat_flops = 2 * B_pad * L * E * (3 * Fh) + 2 * B_pad * (L * E) * (Fv * E) \
        + 2 * B_pad * fc_dim * E
    feat_bytes = (B_pad * L * E * 4 + B_pad * E * cd_size
                  + (E * 3 * Fh + L * E * Fv * E + fc_dim * E) * cd_size
                  + (2 * Fh + Fv * E + E) * 4)
    z = pl.pallas_call(
        caser_features_kernel,
        out_shape=jax.ShapeDtypeStruct((B_pad, E), compute_dtype),
        grid_spec=pltpu.PrefetchScalarGridSpec(
            num_scalar_prefetch=0,
            grid=(nb,),
            in_specs=[
                pl.BlockSpec((TB, L, E), lambda i: (i, 0, 0)),   # x batch tile
                pl.BlockSpec((E, 3 * Fh), const2),               # fused h-conv weight
                pl.BlockSpec((1, Fh), const2),                   # bh1
                pl.BlockSpec((1, Fh), const2),                   # bh2
                pl.BlockSpec((L * E, Fv * E), const2),           # block-diag v-conv weight
                pl.BlockSpec((1, Fv * E), const2),               # v-conv bias (flattened)
                pl.BlockSpec((Fh, E), const2),                   # fc1 rows for h1
                pl.BlockSpec((Fh, E), const2),                   # fc1 rows for h2
                pl.BlockSpec((Fv * E, E), const2),               # fc1 rows for v_flat
                pl.BlockSpec((1, E), const2),                    # fc1 bias
            ],
            out_specs=pl.BlockSpec((TB, E), lambda i: (i, 0)),
        ),
        compiler_params=pltpu.CompilerParams(
            dimension_semantics=("parallel",),
            vmem_limit_bytes=64 * 1024 * 1024),
        cost_estimate=pl.CostEstimate(flops=feat_flops, transcendentals=0,
                                      bytes_accessed=feat_bytes),
    )(x, w3, bh1, bh2, wvx, bvx, w1h1, w1h2, w1v, fc1b)

    # -------------------- pallas_call 2: fc2 GEMM -> out[B_pad, N_pad] --------------------
    # Item axis is the slow/outer grid axis so each fc2 weight tile streams from HBM once;
    # both axes are "parallel" (independent output tiles) so v7x megacore splits the work
    # even when there is a single batch tile.
    fc2_flops = 2 * B_pad * E * N_pad
    fc2_bytes = (nj * B_pad * E * cd_size + E * N_pad * cd_size + N_pad * 4
                 + B_pad * N_pad * out_size)
    out = pl.pallas_call(
        caser_fc2_kernel,
        out_shape=jax.ShapeDtypeStruct((B_pad, N_pad), out_dtype),
        grid_spec=pltpu.PrefetchScalarGridSpec(
            num_scalar_prefetch=0,
            grid=(nj, nb),
            in_specs=[
                pl.BlockSpec((TB, E), lambda j, i: (i, 0)),      # z batch tile
                pl.BlockSpec((E, TN), lambda j, i: (0, j)),      # fc2_w^T item tile (slow axis)
                pl.BlockSpec((1, TN), lambda j, i: (0, j)),      # fc2_b item tile
            ],
            out_specs=pl.BlockSpec((TB, TN), lambda j, i: (i, j)),
        ),
        compiler_params=pltpu.CompilerParams(
            dimension_semantics=("parallel", "parallel"),
            vmem_limit_bytes=64 * 1024 * 1024),
        cost_estimate=pl.CostEstimate(flops=fc2_flops, transcendentals=0,
                                      bytes_accessed=fc2_bytes),
    )(z, fc2wt, fc2b)
    return out[:B, :N]


def caser_reference(seq, params, *, num_items, embedding_dim, max_seq_len,
                    num_h_filters, num_v_filters):
    """Pure-JAX reference mirroring the PyTorch forward (eval mode)."""
    E, Fh, Fv = embedding_dim, num_h_filters, num_v_filters
    x = jnp.take(params['emb'], seq, axis=0)                           # [B, L, E]
    B, L, _ = x.shape
    # h conv window 1
    s1 = jnp.einsum('ble,fe->blf', x, params['wh1'][:, 0, 0, :]) + params['bh1']
    h1 = jnp.max(jax.nn.relu(s1), axis=1)
    # h conv window 2
    s2 = (jnp.einsum('ble,fe->blf', x[:, :L - 1], params['wh2'][:, 0, 0, :])
          + jnp.einsum('ble,fe->blf', x[:, 1:], params['wh2'][:, 0, 1, :])
          + params['bh2'])
    h2 = jnp.max(jax.nn.relu(s2), axis=1)
    # v conv
    v = jnp.einsum('ft,bte->bfe', params['wv'][:, 0, :, 0], x) + params['bv'][None, :, None]
    v = jax.nn.relu(v).reshape(B, Fv * E)
    feat = jnp.concatenate([h1, h2, v], axis=1)
    z = jax.nn.relu(feat @ params['fc1_w'].T + params['fc1_b'])
    return z @ params['fc2_w'].T + params['fc2_b']


if __name__ == "__main__":
    # ---- config 1: tiny shapes, single grid tile (default large-tile settings clamp) ----
    num_items = 50
    embedding_dim = 32
    max_seq_len = 8
    num_h_filters = 4
    num_v_filters = 2
    batch = 2

    key = jax.random.PRNGKey(0)
    kp, ks = jax.random.split(key)
    params = init_params(kp, num_items, embedding_dim, max_seq_len,
                         num_h_filters, num_v_filters)
    seq = jax.random.randint(ks, (batch, max_seq_len), 0, num_items + 1, dtype=jnp.int32)

    kwargs = dict(num_items=num_items, embedding_dim=embedding_dim,
                  max_seq_len=max_seq_len, num_h_filters=num_h_filters,
                  num_v_filters=num_v_filters)

    out = jax.block_until_ready(caser_forward(seq, params, **kwargs))
    ref = jax.block_until_ready(caser_reference(seq, params, **kwargs))
    np.testing.assert_allclose(np.asarray(out), np.asarray(ref), rtol=1e-4, atol=1e-4)

    # ---- config 2: exercise multi-tile grid (several batch tiles and item tiles) ----
    num_items2, batch2 = 300, 20
    params2 = init_params(jax.random.PRNGKey(1), num_items2, embedding_dim, max_seq_len,
                          num_h_filters, num_v_filters)
    seq2 = jax.random.randint(jax.random.PRNGKey(2), (batch2, max_seq_len), 0,
                              num_items2 + 1, dtype=jnp.int32)
    kwargs2 = dict(num_items=num_items2, embedding_dim=embedding_dim,
                   max_seq_len=max_seq_len, num_h_filters=num_h_filters,
                   num_v_filters=num_v_filters)

    out2 = jax.block_until_ready(
        caser_forward(seq2, params2, **kwargs2, batch_tile=8, item_tile=128))
    ref2 = jax.block_until_ready(caser_reference(seq2, params2, **kwargs2))
    np.testing.assert_allclose(np.asarray(out2), np.asarray(ref2), rtol=1e-4, atol=1e-4)

    # ---- bf16 MXU operands + bf16 output (v6e/v7x fast path), f32 accumulation; loose tol ----
    out_bf16 = jax.block_until_ready(
        caser_forward(seq2, params2, **kwargs2, compute_dtype=jnp.bfloat16,
                      out_dtype=jnp.bfloat16, batch_tile=8, item_tile=128))
    np.testing.assert_allclose(np.asarray(out_bf16, dtype=np.float32), np.asarray(ref2),
                               rtol=5e-2, atol=5e-2)

    print("KERNEL_OK")
</pallas_src>

<mosaic_0001>
module attributes {stable_mosaic.version = 11 : i64} {
  func.func @caser_features_kernel(%arg0: i32, %arg1: memref<8x8x32xf32, #tpu.memory_space<vmem>>, %arg2: memref<32x12xf32, #tpu.memory_space<vmem>>, %arg3: memref<1x4xf32, #tpu.memory_space<vmem>>, %arg4: memref<1x4xf32, #tpu.memory_space<vmem>>, %arg5: memref<256x64xf32, #tpu.memory_space<vmem>>, %arg6: memref<1x64xf32, #tpu.memory_space<vmem>>, %arg7: memref<4x32xf32, #tpu.memory_space<vmem>>, %arg8: memref<4x32xf32, #tpu.memory_space<vmem>>, %arg9: memref<64x32xf32, #tpu.memory_space<vmem>>, %arg10: memref<1x32xf32, #tpu.memory_space<vmem>>, %arg11: memref<8x32xf32, #tpu.memory_space<vmem>>) attributes {dimension_semantics = [#tpu.dimension_semantics<parallel>], iteration_bounds = array<i64: 1>, scalar_prefetch = 0 : i64, scratch_operands = 0 : i64, tpu.core_type = #tpu.core_type<tc>, window_params = [{transform_indices = @transform_0, window_bounds = array<i64: 8, 8, 32>}, {pipeline_mode = #tpu.pipeline_mode<synchronous>, transform_indices = @transform_1, window_bounds = array<i64: 32, 12>}, {pipeline_mode = #tpu.pipeline_mode<synchronous>, transform_indices = @transform_2, window_bounds = array<i64: 1, 4>}, {pipeline_mode = #tpu.pipeline_mode<synchronous>, transform_indices = @transform_3, window_bounds = array<i64: 1, 4>}, {pipeline_mode = #tpu.pipeline_mode<synchronous>, transform_indices = @transform_4, window_bounds = array<i64: 256, 64>}, {pipeline_mode = #tpu.pipeline_mode<synchronous>, transform_indices = @transform_5, window_bounds = array<i64: 1, 64>}, {pipeline_mode = #tpu.pipeline_mode<synchronous>, transform_indices = @transform_6, window_bounds = array<i64: 4, 32>}, {pipeline_mode = #tpu.pipeline_mode<synchronous>, transform_indices = @transform_7, window_bounds = array<i64: 4, 32>}, {pipeline_mode = #tpu.pipeline_mode<synchronous>, transform_indices = @transform_8, window_bounds = array<i64: 64, 32>}, {pipeline_mode = #tpu.pipeline_mode<synchronous>, transform_indices = @transform_9, window_bounds = array<i64: 1, 32>}, {transform_indices = @transform_10, window_bounds = array<i64: 8, 32>}]} {
    %c0 = arith.constant 0 : index
    %c0_0 = arith.constant 0 : index
    %c0_1 = arith.constant 0 : index
    %0 = vector.load %arg1[%c0, %c0_0, %c0_1] : memref<8x8x32xf32, #tpu.memory_space<vmem>>, vector<8x8x32xf32>
    %1 = vector.shape_cast %0 : vector<8x8x32xf32> to vector<64x32xf32>
    %c0_2 = arith.constant 0 : index
    %c0_3 = arith.constant 0 : index
    %2 = vector.load %arg2[%c0_2, %c0_3] : memref<32x12xf32, #tpu.memory_space<vmem>>, vector<32x12xf32>
    %cst = arith.constant dense<0.000000e+00> : vector<64x12xf32>
    %3 = tpu.matmul %1, %2, %cst {dimension_numbers = #tpu.dot_dimension_numbers<[1], [0], [0], [1], [0, 0, 1, 1], [], []>} : vector<64x32xf32>, vector<32x12xf32>, vector<64x12xf32> -> vector<64x12xf32>
    %4 = vector.shape_cast %3 : vector<64x12xf32> to vector<8x8x12xf32>
    %5 = vector.extract_strided_slice %4 {offsets = [0, 0, 0], sizes = [8, 8, 4], strides = [1, 1, 1]} : vector<8x8x12xf32> to vector<8x8x4xf32>
    %c0_4 = arith.constant 0 : index
    %c0_5 = arith.constant 0 : index
    %6 = vector.load %arg3[%c0_4, %c0_5] : memref<1x4xf32, #tpu.memory_space<vmem>>, vector<1x4xf32>
    %7 = vector.shape_cast %6 : vector<1x4xf32> to vector<1x1x4xf32>
    %8 = vector.broadcast %7 : vector<1x1x4xf32> to vector<8x8x4xf32>
    %9 = arith.addf %5, %8 : vector<8x8x4xf32>
    %cst_6 = arith.constant 0.000000e+00 : f32
    %10 = vector.broadcast %cst_6 : f32 to vector<8x8x4xf32>
    %11 = arith.maximumf %9, %10 : vector<8x8x4xf32>
    %cst_7 = arith.constant dense<0xFF800000> : vector<8x4xf32>
    %12 = vector.multi_reduction <maximumf>, %11, %cst_7 [1] : vector<8x8x4xf32> to vector<8x4xf32>
    %13 = vector.extract_strided_slice %4 {offsets = [0, 0, 4], sizes = [8, 7, 4], strides = [1, 1, 1]} : vector<8x8x12xf32> to vector<8x7x4xf32>
    %14 = vector.extract_strided_slice %4 {offsets = [0, 1, 8], sizes = [8, 7, 4], strides = [1, 1, 1]} : vector<8x8x12xf32> to vector<8x7x4xf32>
    %15 = arith.addf %13, %14 : vector<8x7x4xf32>
    %c0_8 = arith.constant 0 : index
    %c0_9 = arith.constant 0 : index
    %16 = vector.load %arg4[%c0_8, %c0_9] : memref<1x4xf32, #tpu.memory_space<vmem>>, vector<1x4xf32>
    %17 = vector.shape_cast %16 : vector<1x4xf32> to vector<1x1x4xf32>
    %18 = vector.broadcast %17 : vector<1x1x4xf32> to vector<8x7x4xf32>
    %19 = arith.addf %15, %18 : vector<8x7x4xf32>
    %cst_10 = arith.constant 0.000000e+00 : f32
    %20 = vector.broadcast %cst_10 : f32 to vector<8x7x4xf32>
    %21 = arith.maximumf %19, %20 : vector<8x7x4xf32>
    %cst_11 = arith.constant dense<0xFF800000> : vector<8x4xf32>
    %22 = vector.multi_reduction <maximumf>, %21, %cst_11 [1] : vector<8x7x4xf32> to vector<8x4xf32>
    %23 = vector.shape_cast %0 : vector<8x8x32xf32> to vector<8x256xf32>
    %c0_12 = arith.constant 0 : index
    %c0_13 = arith.constant 0 : index
    %24 = vector.load %arg5[%c0_12, %c0_13] : memref<256x64xf32, #tpu.memory_space<vmem>>, vector<256x64xf32>
    %cst_14 = arith.constant dense<0.000000e+00> : vector<8x64xf32>
    %25 = tpu.matmul %23, %24, %cst_14 {dimension_numbers = #tpu.dot_dimension_numbers<[1], [0], [0], [1], [0, 0, 1, 1], [], []>} : vector<8x256xf32>, vector<256x64xf32>, vector<8x64xf32> -> vector<8x64xf32>
    %c0_15 = arith.constant 0 : index
    %c0_16 = arith.constant 0 : index
    %26 = vector.load %arg6[%c0_15, %c0_16] : memref<1x64xf32, #tpu.memory_space<vmem>>, vector<1x64xf32>
    %27 = vector.broadcast %26 : vector<1x64xf32> to vector<8x64xf32>
    %28 = arith.addf %25, %27 : vector<8x64xf32>
    %cst_17 = arith.constant 0.000000e+00 : f32
    %29 = vector.broadcast %cst_17 : f32 to vector<8x64xf32>
    %30 = arith.maximumf %28, %29 : vector<8x64xf32>
    %c0_18 = arith.constant 0 : index
    %c0_19 = arith.constant 0 : index
    %31 = vector.load %arg7[%c0_18, %c0_19] : memref<4x32xf32, #tpu.memory_space<vmem>>, vector<4x32xf32>
    %cst_20 = arith.constant dense<0.000000e+00> : vector<8x32xf32>
    %32 = tpu.matmul %12, %31, %cst_20 {dimension_numbers = #tpu.dot_dimension_numbers<[1], [0], [0], [1], [0, 0, 1, 1], [], []>} : vector<8x4xf32>, vector<4x32xf32>, vector<8x32xf32> -> vector<8x32xf32>
    %c0_21 = arith.constant 0 : index
    %c0_22 = arith.constant 0 : index
    %33 = vector.load %arg8[%c0_21, %c0_22] : memref<4x32xf32, #tpu.memory_space<vmem>>, vector<4x32xf32>
    %cst_23 = arith.constant dense<0.000000e+00> : vector<8x32xf32>
    %34 = tpu.matmul %22, %33, %cst_23 {dimension_numbers = #tpu.dot_dimension_numbers<[1], [0], [0], [1], [0, 0, 1, 1], [], []>} : vector<8x4xf32>, vector<4x32xf32>, vector<8x32xf32> -> vector<8x32xf32>
    %35 = arith.addf %32, %34 : vector<8x32xf32>
    %c0_24 = arith.constant 0 : index
    %c0_25 = arith.constant 0 : index
    %36 = vector.load %arg9[%c0_24, %c0_25] : memref<64x32xf32, #tpu.memory_space<vmem>>, vector<64x32xf32>
    %cst_26 = arith.constant dense<0.000000e+00> : vector<8x32xf32>
    %37 = tpu.matmul %30, %36, %cst_26 {dimension_numbers = #tpu.dot_dimension_numbers<[1], [0], [0], [1], [0, 0, 1, 1], [], []>} : vector<8x64xf32>, vector<64x32xf32>, vector<8x32xf32> -> vector<8x32xf32>
    %38 = arith.addf %35, %37 : vector<8x32xf32>
    %c0_27 = arith.constant 0 : index
    %c0_28 = arith.constant 0 : index
    %39 = vector.load %arg10[%c0_27, %c0_28] : memref<1x32xf32, #tpu.memory_space<vmem>>, vector<1x32xf32>
    %40 = vector.broadcast %39 : vector<1x32xf32> to vector<8x32xf32>
    %41 = arith.addf %38, %40 : vector<8x32xf32>
    %cst_29 = arith.constant 0.000000e+00 : f32
    %42 = vector.broadcast %cst_29 : f32 to vector<8x32xf32>
    %43 = arith.maximumf %41, %42 : vector<8x32xf32>
    %c0_30 = arith.constant 0 : index
    %c0_31 = arith.constant 0 : index
    %44 = vector.load %arg11[%c0_30, %c0_31] : memref<8x32xf32, #tpu.memory_space<vmem>>, vector<8x32xf32>
    tpu.vector_store %arg11[%c0_30, %c0_31], %43 {strides = array<i32>} : memref<8x32xf32, #tpu.memory_space<vmem>>, vector<8x32xf32>,
    return
  }
  func.func @transform_0(%arg0: i32) -> (i32, i32, i32) {
    %c0_i32 = arith.constant 0 : i32
    %c0_i32_0 = arith.constant 0 : i32
    %c0_i32_1 = arith.constant 0 : i32
    return %arg0, %c0_i32, %c0_i32_0 : i32, i32, i32
  }
  func.func @transform_1(%arg0: i32) -> (i32, i32) {
    %c0_i32 = arith.constant 0 : i32
    %c0_i32_0 = arith.constant 0 : i32
    %c0_i32_1 = arith.constant 0 : i32
    return %c0_i32, %c0_i32_0 : i32, i32
  }
  func.func @transform_2(%arg0: i32) -> (i32, i32) {
    %c0_i32 = arith.constant 0 : i32
    %c0_i32_0 = arith.constant 0 : i32
    %c0_i32_1 = arith.constant 0 : i32
    return %c0_i32, %c0_i32_0 : i32, i32
  }
  func.func @transform_3(%arg0: i32) -> (i32, i32) {
    %c0_i32 = arith.constant 0 : i32
    %c0_i32_0 = arith.constant 0 : i32
    %c0_i32_1 = arith.constant 0 : i32
    return %c0_i32, %c0_i32_0 : i32, i32
  }
  func.func @transform_4(%arg0: i32) -> (i32, i32) {
    %c0_i32 = arith.constant 0 : i32
    %c0_i32_0 = arith.constant 0 : i32
    %c0_i32_1 = arith.constant 0 : i32
    return %c0_i32, %c0_i32_0 : i32, i32
  }
  func.func @transform_5(%arg0: i32) -> (i32, i32) {
    %c0_i32 = arith.constant 0 : i32
    %c0_i32_0 = arith.constant 0 : i32
    %c0_i32_1 = arith.constant 0 : i32
    return %c0_i32, %c0_i32_0 : i32, i32
  }
  func.func @transform_6(%arg0: i32) -> (i32, i32) {
    %c0_i32 = arith.constant 0 : i32
    %c0_i32_0 = arith.constant 0 : i32
    %c0_i32_1 = arith.constant 0 : i32
    return %c0_i32, %c0_i32_0 : i32, i32
  }
  func.func @transform_7(%arg0: i32) -> (i32, i32) {
    %c0_i32 = arith.constant 0 : i32
    %c0_i32_0 = arith.constant 0 : i32
    %c0_i32_1 = arith.constant 0 : i32
    return %c0_i32, %c0_i32_0 : i32, i32
  }
  func.func @transform_8(%arg0: i32) -> (i32, i32) {
    %c0_i32 = arith.constant 0 : i32
    %c0_i32_0 = arith.constant 0 : i32
    %c0_i32_1 = arith.constant 0 : i32
    return %c0_i32, %c0_i32_0 : i32, i32
  }
  func.func @transform_9(%arg0: i32) -> (i32, i32) {
    %c0_i32 = arith.constant 0 : i32
    %c0_i32_0 = arith.constant 0 : i32
    %c0_i32_1 = arith.constant 0 : i32
    return %c0_i32, %c0_i32_0 : i32, i32
  }
  func.func @transform_10(%arg0: i32) -> (i32, i32) {
    %c0_i32 = arith.constant 0 : i32
    %c0_i32_0 = arith.constant 0 : i32
    return %arg0, %c0_i32 : i32, i32
  }
}

</mosaic_0001>

<llo_original>
// kernel: tpu_custom_call.1
$region0: #{tpu_custom_call.1}
  #allocation0 [shape = 'u32[]', space=smem, size = 0x4, offset = 0x4, fixed_abs, tag = 'smem constant byte address 0x4 - core index']
  #allocation1 [shape = 'u32[144,128]{1,0:T(1,128)}', space=vmem, size = 0x12000, scoped, tag = 'internal scratch']
  %s0 = inlined_call_operand.vmem [shape: f32[8,8,32], index: 0, kind: input, shape index: {}]
  %s1 = inlined_call_operand.vmem [shape: f32[32,12], index: 1, kind: input, shape index: {}]
  %s2 = inlined_call_operand.vmem [shape: f32[1,4], index: 2, kind: input, shape index: {}]
  %s3 = inlined_call_operand.vmem [shape: f32[1,4], index: 3, kind: input, shape index: {}]
  %s4 = inlined_call_operand.vmem [shape: f32[256,64], index: 4, kind: input, shape index: {}]
  %s5 = inlined_call_operand.vmem [shape: f32[1,64], index: 5, kind: input, shape index: {}]
  %s6 = inlined_call_operand.vmem [shape: f32[4,32], index: 6, kind: input, shape index: {}]
  %s7 = inlined_call_operand.vmem [shape: f32[4,32], index: 7, kind: input, shape index: {}]
  %s8 = inlined_call_operand.vmem [shape: f32[64,32], index: 8, kind: input, shape index: {}]
  %s9 = inlined_call_operand.vmem [shape: f32[1,32], index: 9, kind: input, shape index: {}]
  %s10 = inlined_call_operand.hbm [shape: f32[8,32], index: 10, kind: output, shape index: {}]
  %s11 = sld [smem:[#allocation0]]
  $region50: #{tpu_custom_call.1} parent=0
    _
  %s13 = ssub.s32 1, %s11
  %s14 = scalar_select 0, %s13, %s11
  $region1: #{tpu_custom_call.1} parent=0
    #allocation2 [shape = 'u8[4096]{0}', space=vmem, size = 0x1000, scoped, tag = 'output window, operand 0, single buffered']
    #allocation3 [shape = 's32[1]{0}', space=sflag, size = 0x4, scoped, tag = 'scoped memory for tpu_custom_call.1']
    %15 = vsyncpa [#allocation3], 0
    // Predicated region
    $region2: #{tpu_custom_call.1} parent=1 // pred_check
      _
    $region3: #{tpu_custom_call.1} parent=1 // pred_check_branch
      %17 = sbr.rel (0) target = $region5
    $region4: #{tpu_custom_call.1} parent=1 // pred_region
      _
    $region5: #{tpu_custom_call.1} parent=1 // pred_fallthru
      _
    // Predicated region
    $region6: #{tpu_custom_call.1} parent=1 // pred_check
      _
    $region7: #{tpu_custom_call.1} parent=1 // pred_check_branch
      %19 = sbr.rel (0) target = $region9
    $region8: #{tpu_custom_call.1} parent=1 // pred_region
      _
    $region9: #{tpu_custom_call.1} parent=1 // pred_fallthru
      _
    // Predicated region
    $region10: #{tpu_custom_call.1} parent=1 // pred_check
      _
    $region11: #{tpu_custom_call.1} parent=1 // pred_check_branch
      %21 = sbr.rel (0) target = $region13
    $region12: #{tpu_custom_call.1} parent=1 // pred_region
      _
    $region13: #{tpu_custom_call.1} parent=1 // pred_fallthru
      _
    // Predicated region
    $region14: #{tpu_custom_call.1} parent=1 // pred_check
      _
    $region15: #{tpu_custom_call.1} parent=1 // pred_check_branch
      %23 = sbr.rel (0) target = $region17
    $region16: #{tpu_custom_call.1} parent=1 // pred_region
      _
    $region17: #{tpu_custom_call.1} parent=1 // pred_fallthru
      _
    // Predicated region
    $region18: #{tpu_custom_call.1} parent=1 // pred_check
      _
    $region19: #{tpu_custom_call.1} parent=1 // pred_check_branch
      %25 = sbr.rel (0) target = $region21
    $region20: #{tpu_custom_call.1} parent=1 // pred_region
      _
    $region21: #{tpu_custom_call.1} parent=1 // pred_fallthru
      _
    // Predicated region
    $region22: #{tpu_custom_call.1} parent=1 // pred_check
      _
    $region23: #{tpu_custom_call.1} parent=1 // pred_check_branch
      %27 = sbr.rel (0) target = $region25
    $region24: #{tpu_custom_call.1} parent=1 // pred_region
      _
    $region25: #{tpu_custom_call.1} parent=1 // pred_fallthru
      _
    // Predicated region
    $region26: #{tpu_custom_call.1} parent=1 // pred_check
      _
    $region27: #{tpu_custom_call.1} parent=1 // pred_check_branch
      %29 = sbr.rel (0) target = $region29
    $region28: #{tpu_custom_call.1} parent=1 // pred_region
      _
    $region29: #{tpu_custom_call.1} parent=1 // pred_fallthru
      _
    // Predicated region
    $region30: #{tpu_custom_call.1} parent=1 // pred_check
      _
    $region31: #{tpu_custom_call.1} parent=1 // pred_check_branch
      %31 = sbr.rel (0) target = $region33
    $region32: #{tpu_custom_call.1} parent=1 // pred_region
      _
    $region33: #{tpu_custom_call.1} parent=1 // pred_fallthru
      _
    // Predicated region
    $region34: #{tpu_custom_call.1} parent=1 // pred_check
      _
    $region35: #{tpu_custom_call.1} parent=1 // pred_check_branch
      %33 = sbr.rel (0) target = $region37
    $region36: #{tpu_custom_call.1} parent=1 // pred_region
      _
    $region37: #{tpu_custom_call.1} parent=1 // pred_fallthru
      _
    // Predicated region
    $region38: #{tpu_custom_call.1} parent=1 // pred_check
      _
    $region39: #{tpu_custom_call.1} parent=1 // pred_check_branch
      %35 = sbr.rel (0) target = $region41
    $region40: #{tpu_custom_call.1} parent=1 // pred_region
      _
    $region41: #{tpu_custom_call.1} parent=1 // pred_fallthru
      _
    %v36 = vld [vmem:[%s0] sm:$0xff]
    %v37 = vld [vmem:[%s0 + $0x8] sm:$0xff]
    %v38 = vld [vmem:[%s0 + $0x10] sm:$0xff]
    %v39 = vld [vmem:[%s0 + $0x18] sm:$0xff]
    %v40 = vld [vmem:[%s0 + $0x20] sm:$0xff]
    %v41 = vld [vmem:[%s0 + $0x28] sm:$0xff]
    %v42 = vld [vmem:[%s0 + $0x30] sm:$0xff]
    %v43 = vld [vmem:[%s0 + $0x38] sm:$0xff]
    %v44 = vld [vmem:[%s1] sm:$0xff]
    %v45 = vld [vmem:[%s1 + $0x8] sm:$0xff]
    %v46 = vld [vmem:[%s1 + $0x10] sm:$0xff]
    %v47 = vld [vmem:[%s1 + $0x18] sm:$0xff]
    %vm48 = vcmask 261120
    %v50 = vsel %vm48, %v36, 0
    %v53 = vsel %vm48, %v37, 0
    %v56 = vsel %vm48, %v38, 0
    %v59 = vsel %vm48, %v39, 0
    %v62 = vsel %vm48, %v40, 0
    %v65 = vsel %vm48, %v41, 0
    %v68 = vsel %vm48, %v42, 0
    %v71 = vsel %vm48, %v43, 0
    %73 = vmatprep.subr.mxu0 0.0
    %74 = vmatpush1.msra.mxu0 0.0
    %75 = vmatprep.subr.mxu0 0.0
    %76 = vmatpush1.msra.mxu0 0.0
    %77 = vmatprep.subr.mxu0 0.0
    %78 = vmatpush1.msra.mxu0 0.0
    %79 = vmatprep.subr.mxu0 0.0
    %80 = vmatpush1.msra.mxu0 0.0
    %81 = vmatprep.subr.mxu0 0.0
    %82 = vmatpush1.msra.mxu0 0.0
    %83 = vmatprep.subr.mxu0 0.0
    %84 = vmatpush1.msra.mxu0 0.0
    %85 = vmatprep.subr.mxu0 0.0
    %86 = vmatpush1.msra.mxu0 0.0
    %87 = vmatprep.subr.mxu0 0.0
    %88 = vmatpush1.msra.mxu0 0.0
    %89 = vmatprep.subr.mxu0 0.0
    %90 = vmatpush1.msra.mxu0 0.0
    %91 = vmatprep.subr.mxu0 0.0
    %92 = vmatpush1.msra.mxu0 0.0
    %93 = vmatprep.subr.mxu0 0.0
    %94 = vmatpush1.msra.mxu0 0.0
    %95 = vmatprep.subr.mxu0 0.0
    %96 = vmatpush1.msra.mxu0 0.0
    %97 = vmatprep.subr.mxu0 0.0
    %98 = vmatpush1.msra.mxu0 %v47
    %99 = vmatprep.subr.mxu0 0.0
    %100 = vmatpush1.msra.mxu0 %v46
    %101 = vmatprep.subr.mxu0 0.0
    %102 = vmatpush1.msra.mxu0 %v45
    %103 = vmatprep.subr.mxu0 0.0
    %104 = vmatpush1.msra.mxu0 %v44
    %105 = vmatprep.subr.mxu0 0.0
    %106 = vmatpush2.msra.mxu0 0.0
    %107 = vmatprep.subr.mxu0 0.0
    %108 = vmatpush2.msra.mxu0 0.0
    %109 = vmatprep.subr.mxu0 0.0
    %110 = vmatpush2.msra.mxu0 0.0
    %111 = vmatprep.subr.mxu0 0.0
    %112 = vmatpush2.msra.mxu0 0.0
    %113 = vmatprep.subr.mxu0 0.0
    %114 = vmatpush2.msra.mxu0 0.0
    %115 = vmatprep.subr.mxu0 0.0
    %116 = vmatpush2.msra.mxu0 0.0
    %117 = vmatprep.subr.mxu0 0.0
    %118 = vmatpush2.msra.mxu0 0.0
    %119 = vmatprep.subr.mxu0 0.0
    %120 = vmatpush2.msra.mxu0 0.0
    %121 = vmatprep.subr.mxu0 0.0
    %122 = vmatpush2.msra.mxu0 0.0
    %123 = vmatprep.subr.mxu0 0.0
    %124 = vmatpush2.msra.mxu0 0.0
    %125 = vmatprep.subr.mxu0 0.0
    %126 = vmatpush2.msra.mxu0 0.0
    %127 = vmatprep.subr.mxu0 0.0
    %128 = vmatpush2.msra.mxu0 0.0
    %129 = vmatprep.subr.mxu0 0.0
    %130 = vmatpush2.msra.mxu0 0.0
    %131 = vmatprep.subr.mxu0 0.0
    %132 = vmatpush2.msra.mxu0 0.0
    %133 = vmatprep.subr.mxu0 0.0
    %134 = vmatpush2.msra.mxu0 0.0
    %135 = vmatprep.subr.mxu0 0.0
    %136 = vmatpush2.msra.mxu0 0.0
    %137 = vmatprep.mubr.f32.mxu0 0.0
    %138 = vmatmul.mubr.f32.gmra.mxu0 %v50
    %v139 = vpop.f32.mrf.mxu0
    %v140 = vadd.f32 0.0, %v139
    %v141 = vpop.f32.mrf.mxu0
    %142 = vmatprep.mubr.f32.mxu0 0.0
    %143 = vmatmul.mubr.f32.gmra.mxu0 %v53
    %v144 = vpop.f32.mrf.mxu0
    %v145 = vadd.f32 0.0, %v144
    %v146 = vpop.f32.mrf.mxu0
    %147 = vmatprep.mubr.f32.mxu0 0.0
    %148 = vmatmul.mubr.f32.gmra.mxu0 %v56
    %v149 = vpop.f32.mrf.mxu0
    %v150 = vadd.f32 0.0, %v149
    %v151 = vpop.f32.mrf.mxu0
    %152 = vmatprep.mubr.f32.mxu0 0.0
    %153 = vmatmul.mubr.f32.gmra.mxu0 %v59
    %v154 = vpop.f32.mrf.mxu0
    %v155 = vadd.f32 0.0, %v154
    %v156 = vpop.f32.mrf.mxu0
    %157 = vmatprep.mubr.f32.mxu0 0.0
    %158 = vmatmul.mubr.f32.gmra.mxu0 %v62
    %v159 = vpop.f32.mrf.mxu0
    %v160 = vadd.f32 0.0, %v159
    %v161 = vpop.f32.mrf.mxu0
    %162 = vmatprep.mubr.f32.mxu0 0.0
    %163 = vmatmul.mubr.f32.gmra.mxu0 %v65
    %v164 = vpop.f32.mrf.mxu0
    %v165 = vadd.f32 0.0, %v164
    %v166 = vpop.f32.mrf.mxu0
    %167 = vmatprep.mubr.f32.mxu0 0.0
    %168 = vmatmul.mubr.f32.gmra.mxu0 %v68
    %v169 = vpop.f32.mrf.mxu0
    %v170 = vadd.f32 0.0, %v169
    %v171 = vpop.f32.mrf.mxu0
    %172 = vmatprep.mubr.f32.mxu0 0.0
    %173 = vmatmul.mubr.f32.gmra.mxu0 %v71
    %v174 = vpop.f32.mrf.mxu0
    %v175 = vadd.f32 0.0, %v174
    %v176 = vpop.f32.mrf.mxu0
    %177 = vdwg.mxu0
    %v178 = vld [vmem:[%s2] sm:$0x1]
    %v180 = vlaneseq
    %v181 = vshrl.u32 %v180, 7
    %v182 = vsub.s32 0, %v181
    %v183 = vrot.slane %v178, %v182
    %v185 = vadd.f32 %v140, %v183
    %v186 = vadd.f32 %v145, %v183
    %v187 = vadd.f32 %v150, %v183
    %v188 = vadd.f32 %v155, %v183
    %v189 = vadd.f32 %v160, %v183
    %v190 = vadd.f32 %v165, %v183
    %v191 = vadd.f32 %v170, %v183
    %v192 = vadd.f32 %v175, %v183
    %v193 = vmax.f32 %v185, 0.0
    %v194 = vmax.f32 %v186, 0.0
    %v195 = vmax.f32 %v187, 0.0
    %v196 = vmax.f32 %v188, 0.0
    %v197 = vmax.f32 %v189, 0.0
    %v198 = vmax.f32 %v190, 0.0
    %v199 = vmax.f32 %v191, 0.0
    %v200 = vmax.f32 %v192, 0.0
    %vm201 = vcmask 31744
    %v202 = vsel %vm201, %v193, -inf
    %v203 = vrot.slane %v202, 4
    %v204 = vmax.f32 %v202, %v203
    %v205 = vrot.slane %v204, 2
    %v206 = vmax.f32 %v204, %v205
    %v207 = vrot.slane %v206, 1
    %v208 = vmax.f32 %v206, %v207
    %v209 = vsel %vm201, %v194, -inf
    %v210 = vrot.slane %v209, 4
    %v211 = vmax.f32 %v209, %v210
    %v212 = vrot.slane %v211, 2
    %v213 = vmax.f32 %v211, %v212
    %v214 = vrot.slane %v213, 1
    %v215 = vmax.f32 %v213, %v214
    %v216 = vsel %vm201, %v195, -inf
    %v217 = vrot.slane %v216, 4
    %v218 = vmax.f32 %v216, %v217
    %v219 = vrot.slane %v218, 2
    %v220 = vmax.f32 %v218, %v219
    %v221 = vrot.slane %v220, 1
    %v222 = vmax.f32 %v220, %v221
    %v223 = vsel %vm201, %v196, -inf
    %v224 = vrot.slane %v223, 4
    %v225 = vmax.f32 %v223, %v224
    %v226 = vrot.slane %v225, 2
    %v227 = vmax.f32 %v225, %v226
    %v228 = vrot.slane %v227, 1
    %v229 = vmax.f32 %v227, %v228
    %v230 = vsel %vm201, %v197, -inf
    %v231 = vrot.slane %v230, 4
    %v232 = vmax.f32 %v230, %v231
    %v233 = vrot.slane %v232, 2
    %v234 = vmax.f32 %v232, %v233
    %v235 = vrot.slane %v234, 1
    %v236 = vmax.f32 %v234, %v235
    %v237 = vsel %vm201, %v198, -inf
    %v238 = vrot.slane %v237, 4
    %v239 = vmax.f32 %v237, %v238
    %v240 = vrot.slane %v239, 2
    %v241 = vmax.f32 %v239, %v240
    %v242 = vrot.slane %v241, 1
    %v243 = vmax.f32 %v241, %v242
    %v244 = vsel %vm201, %v199, -inf
    %v245 = vrot.slane %v244, 4
    %v246 = vmax.f32 %v244, %v245
    %v247 = vrot.slane %v246, 2
    %v248 = vmax.f32 %v246, %v247
    %v249 = vrot.slane %v248, 1
    %v250 = vmax.f32 %v248, %v249
    %v251 = vsel %vm201, %v200, -inf
    %v252 = vrot.slane %v251, 4
    %v253 = vmax.f32 %v251, %v252
    %v254 = vrot.slane %v253, 2
    %v255 = vmax.f32 %v253, %v254
    %v256 = vrot.slane %v255, 1
    %v257 = vmax.f32 %v255, %v256
    %v266 = vrot.slane %v140, 1
    %v267 = vrot.slane %v145, 1
    %v268 = vrot.slane %v150, 1
    %v269 = vrot.slane %v155, 1
    %v270 = vrot.slane %v160, 1
    %v271 = vrot.slane %v165, 1
    %v272 = vrot.slane %v170, 1
    %v273 = vrot.slane %v175, 1
    %274 = vrot.lane.b32.xlu0 %v266, 124
    %v275 = vpop.permute.xlu0 %274
    %276 = vrot.lane.b32.xlu0 %v267, 124
    %v277 = vpop.permute.xlu0 %276
    %278 = vrot.lane.b32.xlu0 %v268, 124
    %v279 = vpop.permute.xlu0 %278
    %280 = vrot.lane.b32.xlu0 %v269, 124
    %v281 = vpop.permute.xlu0 %280
    %282 = vrot.lane.b32.xlu0 %v270, 124
    %v283 = vpop.permute.xlu0 %282
    %284 = vrot.lane.b32.xlu0 %v271, 124
    %v285 = vpop.permute.xlu0 %284
    %286 = vrot.lane.b32.xlu0 %v272, 124
    %v287 = vpop.permute.xlu0 %286
    %288 = vrot.lane.b32.xlu0 %v273, 124
    %v289 = vpop.permute.xlu0 %288
    %v298 = vadd.f32 %v140, %v275
    %v299 = vadd.f32 %v145, %v277
    %v300 = vadd.f32 %v150, %v279
    %v301 = vadd.f32 %v155, %v281
    %v302 = vadd.f32 %v160, %v283
    %v303 = vadd.f32 %v165, %v285
    %v304 = vadd.f32 %v170, %v287
    %v305 = vadd.f32 %v175, %v289
    %v306 = vld [vmem:[%s3] sm:$0x1]
    %v308 = vlaneseq
    %v309 = vshrl.u32 %v308, 7
    %v310 = vsub.s32 0, %v309
    %v311 = vrot.slane %v306, %v310
    %312 = vrot.lane.b32.xlu0 %v311, 4
    %v313 = vpop.permute.xlu0 %312
    %v315 = vadd.f32 %v298, %v313
    %v316 = vadd.f32 %v299, %v313
    %v317 = vadd.f32 %v300, %v313
    %v318 = vadd.f32 %v301, %v313
    %v319 = vadd.f32 %v302, %v313
    %v320 = vadd.f32 %v303, %v313
    %v321 = vadd.f32 %v304, %v313
    %v322 = vadd.f32 %v305, %v313
    %v323 = vmax.f32 %v315, 0.0
    %v324 = vmax.f32 %v316, 0.0
    %v325 = vmax.f32 %v317, 0.0
    %v326 = vmax.f32 %v318, 0.0
    %v327 = vmax.f32 %v319, 0.0
    %v328 = vmax.f32 %v320, 0.0
    %v329 = vmax.f32 %v321, 0.0
    %v330 = vmax.f32 %v322, 0.0
    %vm331 = vcmask 63520
    %v332 = vsel %vm331, %v323, -inf
    %v333 = vrot.slane %v332, 4
    %v334 = vmax.f32 %v332, %v333
    %v335 = vrot.slane %v334, 2
    %v336 = vmax.f32 %v334, %v335
    %v337 = vrot.slane %v336, 1
    %v338 = vmax.f32 %v336, %v337
    %v339 = vsel %vm331, %v324, -inf
    %v340 = vrot.slane %v339, 4
    %v341 = vmax.f32 %v339, %v340
    %v342 = vrot.slane %v341, 2
    %v343 = vmax.f32 %v341, %v342
    %v344 = vrot.slane %v343, 1
    %v345 = vmax.f32 %v343, %v344
    %v346 = vsel %vm331, %v325, -inf
    %v347 = vrot.slane %v346, 4
    %v348 = vmax.f32 %v346, %v347
    %v349 = vrot.slane %v348, 2
    %v350 = vmax.f32 %v348, %v349
    %v351 = vrot.slane %v350, 1
    %v352 = vmax.f32 %v350, %v351
    %v353 = vsel %vm331, %v326, -inf
    %v354 = vrot.slane %v353, 4
    %v355 = vmax.f32 %v353, %v354
    %v356 = vrot.slane %v355, 2
    %v357 = vmax.f32 %v355, %v356
    %v358 = vrot.slane %v357, 1
    %v359 = vmax.f32 %v357, %v358
    %v360 = vsel %vm331, %v327, -inf
    %v361 = vrot.slane %v360, 4
    %v362 = vmax.f32 %v360, %v361
    %v363 = vrot.slane %v362, 2
    %v364 = vmax.f32 %v362, %v363
    %v365 = vrot.slane %v364, 1
    %v366 = vmax.f32 %v364, %v365
    %v367 = vsel %vm331, %v328, -inf
    %v368 = vrot.slane %v367, 4
    %v369 = vmax.f32 %v367, %v368
    %v370 = vrot.slane %v369, 2
    %v371 = vmax.f32 %v369, %v370
    %v372 = vrot.slane %v371, 1
    %v373 = vmax.f32 %v371, %v372
    %v374 = vsel %vm331, %v329, -inf
    %v375 = vrot.slane %v374, 4
    %v376 = vmax.f32 %v374, %v375
    %v377 = vrot.slane %v376, 2
    %v378 = vmax.f32 %v376, %v377
    %v379 = vrot.slane %v378, 1
    %v380 = vmax.f32 %v378, %v379
    %v381 = vsel %vm331, %v330, -inf
    %v382 = vrot.slane %v381, 4
    %v383 = vmax.f32 %v381, %v382
    %v384 = vrot.slane %v383, 2
    %v385 = vmax.f32 %v383, %v384
    %v386 = vrot.slane %v385, 1
    %v387 = vmax.f32 %v385, %v386
    %v388 = vcombine.low %v36, %v38
    %v389 = vcombine.high %v36, %v38
    %v391 = vunpack.c.l.s4 1983009808
    %v392 = vunpack.c.0.s8 %v391
    %v393 = vlaneseq
    %v394 = vshrl.u32 %v393, 7
    %v395 = vsub.s32 %v392, %v394
    %v396 = vrot.slane %v388, %v395
    %v398 = vunpack.c.l.s4 1983009808
    %v399 = vunpack.c.0.s8 %v398
    %v400 = vlaneseq
    %v401 = vshrl.u32 %v400, 7
    %v402 = vsub.s32 %v399, %v401
    %v403 = vrot.slane %v389, %v402
    %v404 = vcombine.low %v37, %v39
    %v405 = vcombine.high %v37, %v39
    %v407 = vunpack.c.l.s4 1983009808
    %v408 = vunpack.c.0.s8 %v407
    %v409 = vlaneseq
    %v410 = vshrl.u32 %v409, 7
    %v411 = vsub.s32 %v408, %v410
    %v412 = vrot.slane %v404, %v411
    %v414 = vunpack.c.l.s4 1983009808
    %v415 = vunpack.c.0.s8 %v414
    %v416 = vlaneseq
    %v417 = vshrl.u32 %v416, 7
    %v418 = vsub.s32 %v415, %v417
    %v419 = vrot.slane %v405, %v418
    %v420 = vcombine.low %v40, %v42
    %v421 = vcombine.high %v40, %v42
    %v423 = vunpack.c.l.s4 1983009808
    %v424 = vunpack.c.0.s8 %v423
    %v425 = vlaneseq
    %v426 = vshrl.u32 %v425, 7
    %v427 = vsub.s32 %v424, %v426
    %v428 = vrot.slane %v420, %v427
    %v430 = vunpack.c.l.s4 1983009808
    %v431 = vunpack.c.0.s8 %v430
    %v432 = vlaneseq
    %v433 = vshrl.u32 %v432, 7
    %v434 = vsub.s32 %v431, %v433
    %v435 = vrot.slane %v421, %v434
    %v436 = vcombine.low %v41, %v43
    %v437 = vcombine.high %v41, %v43
    %v439 = vunpack.c.l.s4 1983009808
    %v440 = vunpack.c.0.s8 %v439
    %v441 = vlaneseq
    %v442 = vshrl.u32 %v441, 7
    %v443 = vsub.s32 %v440, %v442
    %v444 = vrot.slane %v436, %v443
    %v446 = vunpack.c.l.s4 1983009808
    %v447 = vunpack.c.0.s8 %v446
    %v448 = vlaneseq
    %v449 = vshrl.u32 %v448, 7
    %v450 = vsub.s32 %v447, %v449
    %v451 = vrot.slane %v437, %v450
    %v452 = vcombine.low %v396, %v412
    %v453 = vcombine.high %v396, %v412
    %v455 = vunpack.c.l.s4 1934713408
    %v456 = vunpack.c.0.s8 %v455
    %v457 = vlaneseq
    %v458 = vshrl.u32 %v457, 7
    %v459 = vsub.s32 %v456, %v458
    %v460 = vrot.slane %v452, %v459
    %v462 = vunpack.c.l.s4 1934713408
    %v463 = vunpack.c.0.s8 %v462
    %v464 = vlaneseq
    %v465 = vshrl.u32 %v464, 7
    %v466 = vsub.s32 %v463, %v465
    %v467 = vrot.slane %v453, %v466
    %v468 = vcombine.low %v403, %v419
    %v469 = vcombine.high %v403, %v419
    %v471 = vunpack.c.l.s4 1934713408
    %v472 = vunpack.c.0.s8 %v471
    %v473 = vlaneseq
    %v474 = vshrl.u32 %v473, 7
    %v475 = vsub.s32 %v472, %v474
    %v476 = vrot.slane %v468, %v475
    %v478 = vunpack.c.l.s4 1934713408
    %v479 = vunpack.c.0.s8 %v478
    %v480 = vlaneseq
    %v481 = vshrl.u32 %v480, 7
    %v482 = vsub.s32 %v479, %v481
    %v483 = vrot.slane %v469, %v482
    %v484 = vcombine.low %v428, %v444
    %v485 = vcombine.high %v428, %v444
    %v487 = vunpack.c.l.s4 1934713408
    %v488 = vunpack.c.0.s8 %v487
    %v489 = vlaneseq
    %v490 = vshrl.u32 %v489, 7
    %v491 = vsub.s32 %v488, %v490
    %v492 = vrot.slane %v484, %v491
    %v494 = vunpack.c.l.s4 1934713408
    %v495 = vunpack.c.0.s8 %v494
    %v496 = vlaneseq
    %v497 = vshrl.u32 %v496, 7
    %v498 = vsub.s32 %v495, %v497
    %v499 = vrot.slane %v485, %v498
    %v500 = vcombine.low %v435, %v451
    %v501 = vcombine.high %v435, %v451
    %v503 = vunpack.c.l.s4 1934713408
    %v504 = vunpack.c.0.s8 %v503
    %v505 = vlaneseq
    %v506 = vshrl.u32 %v505, 7
    %v507 = vsub.s32 %v504, %v506
    %v508 = vrot.slane %v500, %v507
    %v510 = vunpack.c.l.s4 1934713408
    %v511 = vunpack.c.0.s8 %v510
    %v512 = vlaneseq
    %v513 = vshrl.u32 %v512, 7
    %v514 = vsub.s32 %v511, %v513
    %v515 = vrot.slane %v501, %v514
    %v516 = vcombine.low %v460, %v492
    %v517 = vcombine.high %v460, %v492
    %v518 = vcombine.low %v467, %v499
    %v519 = vcombine.high %v467, %v499
    %v520 = vcombine.low %v476, %v508
    %v521 = vcombine.high %v476, %v508
    %v522 = vcombine.low %v483, %v515
    %v523 = vcombine.high %v483, %v515
    %525 = vrot.lane.b32.xlu0 %v517, 32
    %v526 = vpop.permute.xlu0 %525
    %529 = vrot.lane.b32.xlu0 %v518, 64
    %v530 = vpop.permute.xlu0 %529
    %533 = vrot.lane.b32.xlu0 %v519, 96
    %v534 = vpop.permute.xlu0 %533
    %537 = vrot.lane.b32.xlu0 %v521, 32
    %v538 = vpop.permute.xlu0 %537
    %541 = vrot.lane.b32.xlu0 %v522, 64
    %v542 = vpop.permute.xlu0 %541
    %545 = vrot.lane.b32.xlu0 %v523, 96
    %v546 = vpop.permute.xlu0 %545
    %v548 = vsel %vm48, %v516, %v526
    %vm549 = vcmask 523264
    %v550 = vsel %vm549, %v548, %v530
    %vm551 = vcmask 785408
    %v552 = vsel %vm551, %v550, %v534
    %v553 = vsel %vm48, %v520, %v538
    %v554 = vsel %vm549, %v553, %v542
    %v555 = vsel %vm551, %v554, %v546
    %v556 = vld [vmem:[%s4] sm:$0xff]
    %v557 = vld [vmem:[%s4 + $0x8] sm:$0xff]
    %v558 = vld [vmem:[%s4 + $0x10] sm:$0xff]
    %v559 = vld [vmem:[%s4 + $0x18] sm:$0xff]
    %v560 = vld [vmem:[%s4 + $0x20] sm:$0xff]
    %v561 = vld [vmem:[%s4 + $0x28] sm:$0xff]
    %v562 = vld [vmem:[%s4 + $0x30] sm:$0xff]
    %v563 = vld [vmem:[%s4 + $0x38] sm:$0xff]
    %v564 = vld [vmem:[%s4 + $0x40] sm:$0xff]
    %v565 = vld [vmem:[%s4 + $0x48] sm:$0xff]
    %v566 = vld [vmem:[%s4 + $0x50] sm:$0xff]
    %v567 = vld [vmem:[%s4 + $0x58] sm:$0xff]
    %v568 = vld [vmem:[%s4 + $0x60] sm:$0xff]
    %v569 = vld [vmem:[%s4 + $0x68] sm:$0xff]
    %v570 = vld [vmem:[%s4 + $0x70] sm:$0xff]
    %v571 = vld [vmem:[%s4 + $0x78] sm:$0xff]
    %v572 = vld [vmem:[%s4 + $0x80] sm:$0xff]
    %v573 = vld [vmem:[%s4 + $0x88] sm:$0xff]
    %v574 = vld [vmem:[%s4 + $0x90] sm:$0xff]
    %v575 = vld [vmem:[%s4 + $0x98] sm:$0xff]
    %v576 = vld [vmem:[%s4 + $0xa0] sm:$0xff]
    %v577 = vld [vmem:[%s4 + $0xa8] sm:$0xff]
    %v578 = vld [vmem:[%s4 + $0xb0] sm:$0xff]
    %v579 = vld [vmem:[%s4 + $0xb8] sm:$0xff]
    %v580 = vld [vmem:[%s4 + $0xc0] sm:$0xff]
    %v581 = vld [vmem:[%s4 + $0xc8] sm:$0xff]
    %v582 = vld [vmem:[%s4 + $0xd0] sm:$0xff]
    %v583 = vld [vmem:[%s4 + $0xd8] sm:$0xff]
    %v584 = vld [vmem:[%s4 + $0xe0] sm:$0xff]
    %v585 = vld [vmem:[%s4 + $0xe8] sm:$0xff]
    %v586 = vld [vmem:[%s4 + $0xf0] sm:$0xff]
    %v587 = vld [vmem:[%s4 + $0xf8] sm:$0xff]
    %v588 = vld [vmem:[%s5] sm:$0x1]
    %v590 = vlaneseq
    %v591 = vshrl.u32 %v590, 7
    %v592 = vsub.s32 0, %v591
    %v593 = vrot.slane %v588, %v592
    %595 = vmatprep.subr.mxu0 0.0
    %596 = vmatpush1.msra.mxu0 %v571
    %597 = vmatprep.subr.mxu0 0.0
    %598 = vmatpush1.msra.mxu0 %v570
    %599 = vmatprep.subr.mxu0 0.0
    %600 = vmatpush1.msra.mxu0 %v569
    %601 = vmatprep.subr.mxu0 0.0
    %602 = vmatpush1.msra.mxu0 %v568
    %603 = vmatprep.subr.mxu0 0.0
    %604 = vmatpush1.msra.mxu0 %v567
    %605 = vmatprep.subr.mxu0 0.0
    %606 = vmatpush1.msra.mxu0 %v566
    %607 = vmatprep.subr.mxu0 0.0
    %608 = vmatpush1.msra.mxu0 %v565
    %609 = vmatprep.subr.mxu0 0.0
    %610 = vmatpush1.msra.mxu0 %v564
    %611 = vmatprep.subr.mxu0 0.0
    %612 = vmatpush1.msra.mxu0 %v563
    %613 = vmatprep.subr.mxu0 0.0
    %614 = vmatpush1.msra.mxu0 %v562
    %615 = vmatprep.subr.mxu0 0.0
    %616 = vmatpush1.msra.mxu0 %v561
    %617 = vmatprep.subr.mxu0 0.0
    %618 = vmatpush1.msra.mxu0 %v560
    %619 = vmatprep.subr.mxu0 0.0
    %620 = vmatpush1.msra.mxu0 %v559
    %621 = vmatprep.subr.mxu0 0.0
    %622 = vmatpush1.msra.mxu0 %v558
    %623 = vmatprep.subr.mxu0 0.0
    %624 = vmatpush1.msra.mxu0 %v557
    %625 = vmatprep.subr.mxu0 0.0
    %626 = vmatpush1.msra.mxu0 %v556
    %627 = vmatprep.subr.mxu0 0.0
    %628 = vmatpush2.msra.mxu0 %v587
    %629 = vmatprep.subr.mxu0 0.0
    %630 = vmatpush2.msra.mxu0 %v586
    %631 = vmatprep.subr.mxu0 0.0
    %632 = vmatpush2.msra.mxu0 %v585
    %633 = vmatprep.subr.mxu0 0.0
    %634 = vmatpush2.msra.mxu0 %v584
    %635 = vmatprep.subr.mxu0 0.0
    %636 = vmatpush2.msra.mxu0 %v583
    %637 = vmatprep.subr.mxu0 0.0
    %638 = vmatpush2.msra.mxu0 %v582
    %639 = vmatprep.subr.mxu0 0.0
    %640 = vmatpush2.msra.mxu0 %v581
    %641 = vmatprep.subr.mxu0 0.0
    %642 = vmatpush2.msra.mxu0 %v580
    %643 = vmatprep.subr.mxu0 0.0
    %644 = vmatpush2.msra.mxu0 %v579
    %645 = vmatprep.subr.mxu0 0.0
    %646 = vmatpush2.msra.mxu0 %v578
    %647 = vmatprep.subr.mxu0 0.0
    %648 = vmatpush2.msra.mxu0 %v577
    %649 = vmatprep.subr.mxu0 0.0
    %650 = vmatpush2.msra.mxu0 %v576
    %651 = vmatprep.subr.mxu0 0.0
    %652 = vmatpush2.msra.mxu0 %v575
    %653 = vmatprep.subr.mxu0 0.0
    %654 = vmatpush2.msra.mxu0 %v574
    %655 = vmatprep.subr.mxu0 0.0
    %656 = vmatpush2.msra.mxu0 %v573
    %657 = vmatprep.subr.mxu0 0.0
    %658 = vmatpush2.msra.mxu0 %v572
    %659 = vmatprep.mubr.f32.mxu0 %v555
    %660 = vmatmul.mubr.f32.gmra.mxu0 %v552
    %v661 = vpop.f32.mrf.mxu0
    %v662 = vadd.f32 %v593, %v661
    %v663 = vpop.f32.mrf.mxu0
    %664 = vdwg.mxu0
    %v665 = vmax.f32 %v662, 0.0
    %v666 = vld [vmem:[%s6] sm:$0xf]
    %v667 = vld [vmem:[%s7] sm:$0xf]
    %vm676 = vcmask 1041409
    %v677 = vsel %vm676, %v345, %v338
    %vm678 = vcmask 1042434
    %v679 = vsel %vm678, %v352, %v677
    %vm680 = vcmask 1043459
    %v681 = vsel %vm680, %v359, %v679
    %vm682 = vcmask 1044484
    %v683 = vsel %vm682, %v366, %v681
    %vm684 = vcmask 1045509
    %v685 = vsel %vm684, %v373, %v683
    %vm686 = vcmask 1046534
    %v687 = vsel %vm686, %v380, %v685
    %vm688 = vcmask 1047559
    %v689 = vsel %vm688, %v387, %v687
    %690 = vrot.lane.b32.xlu0 %v689, 124
    %v691 = vpop.permute.xlu0 %690
    %v692 = vsel %vm201, %v691, 0
    %vm694 = vcmask 1043456
    %v696 = vsel %vm694, %v667, 0
    %698 = vmatprep.subr.mxu0 0.0
    %699 = vmatpush1.msra.mxu0 0.0
    %700 = vmatprep.subr.mxu0 0.0
    %701 = vmatpush1.msra.mxu0 0.0
    %702 = vmatprep.subr.mxu0 0.0
    %703 = vmatpush1.msra.mxu0 0.0
    %704 = vmatprep.subr.mxu0 0.0
    %705 = vmatpush1.msra.mxu0 0.0
    %706 = vmatprep.subr.mxu0 0.0
    %707 = vmatpush1.msra.mxu0 0.0
    %708 = vmatprep.subr.mxu0 0.0
    %709 = vmatpush1.msra.mxu0 0.0
    %710 = vmatprep.subr.mxu0 0.0
    %711 = vmatpush1.msra.mxu0 0.0
    %712 = vmatprep.subr.mxu0 0.0
    %713 = vmatpush1.msra.mxu0 0.0
    %714 = vmatprep.subr.mxu0 0.0
    %715 = vmatpush1.msra.mxu0 0.0
    %716 = vmatprep.subr.mxu0 0.0
    %717 = vmatpush1.msra.mxu0 0.0
    %718 = vmatprep.subr.mxu0 0.0
    %719 = vmatpush1.msra.mxu0 0.0
    %720 = vmatprep.subr.mxu0 0.0
    %721 = vmatpush1.msra.mxu0 0.0
    %722 = vmatprep.subr.mxu0 0.0
    %723 = vmatpush1.msra.mxu0 0.0
    %724 = vmatprep.subr.mxu0 0.0
    %725 = vmatpush1.msra.mxu0 0.0
    %726 = vmatprep.subr.mxu0 0.0
    %727 = vmatpush1.msra.mxu0 0.0
    %728 = vmatprep.subr.mxu0 0.0
    %729 = vmatpush1.msra.mxu0 %v696
    %730 = vmatprep.subr.mxu0 0.0
    %731 = vmatpush2.msra.mxu0 0.0
    %732 = vmatprep.subr.mxu0 0.0
    %733 = vmatpush2.msra.mxu0 0.0
    %734 = vmatprep.subr.mxu0 0.0
    %735 = vmatpush2.msra.mxu0 0.0
    %736 = vmatprep.subr.mxu0 0.0
    %737 = vmatpush2.msra.mxu0 0.0
    %738 = vmatprep.subr.mxu0 0.0
    %739 = vmatpush2.msra.mxu0 0.0
    %740 = vmatprep.subr.mxu0 0.0
    %741 = vmatpush2.msra.mxu0 0.0
    %742 = vmatprep.subr.mxu0 0.0
    %743 = vmatpush2.msra.mxu0 0.0
    %744 = vmatprep.subr.mxu0 0.0
    %745 = vmatpush2.msra.mxu0 0.0
    %746 = vmatprep.subr.mxu0 0.0
    %747 = vmatpush2.msra.mxu0 0.0
    %748 = vmatprep.subr.mxu0 0.0
    %749 = vmatpush2.msra.mxu0 0.0
    %750 = vmatprep.subr.mxu0 0.0
    %751 = vmatpush2.msra.mxu0 0.0
    %752 = vmatprep.subr.mxu0 0.0
    %753 = vmatpush2.msra.mxu0 0.0
    %754 = vmatprep.subr.mxu0 0.0
    %755 = vmatpush2.msra.mxu0 0.0
    %756 = vmatprep.subr.mxu0 0.0
    %757 = vmatpush2.msra.mxu0 0.0
    %758 = vmatprep.subr.mxu0 0.0
    %759 = vmatpush2.msra.mxu0 0.0
    %760 = vmatprep.subr.mxu0 0.0
    %761 = vmatpush2.msra.mxu0 0.0
    %762 = vmatprep.mubr.f32.mxu0 0.0
    %763 = vmatmul.mubr.f32.gmra.mxu0 %v692
    %v764 = vpop.f32.mrf.mxu0
    %v765 = vadd.f32 0.0, %v764
    %v766 = vpop.f32.mrf.mxu0
    %767 = vdwg.mxu0
    %v776 = vsel %vm676, %v215, %v208
    %v777 = vsel %vm678, %v222, %v776
    %v778 = vsel %vm680, %v229, %v777
    %v779 = vsel %vm682, %v236, %v778
    %v780 = vsel %vm684, %v243, %v779
    %v781 = vsel %vm686, %v250, %v780
    %v782 = vsel %vm688, %v257, %v781
    %v783 = vsel %vm201, %v782, 0
    %v786 = vsel %vm694, %v666, 0
    %788 = vmatprep.subr.mxu0 0.0
    %789 = vmatpush1.msra.mxu0 0.0
    %790 = vmatprep.subr.mxu0 0.0
    %791 = vmatpush1.msra.mxu0 0.0
    %792 = vmatprep.subr.mxu0 0.0
    %793 = vmatpush1.msra.mxu0 0.0
    %794 = vmatprep.subr.mxu0 0.0
    %795 = vmatpush1.msra.mxu0 0.0
    %796 = vmatprep.subr.mxu0 0.0
    %797 = vmatpush1.msra.mxu0 0.0
    %798 = vmatprep.subr.mxu0 0.0
    %799 = vmatpush1.msra.mxu0 0.0
    %800 = vmatprep.subr.mxu0 0.0
    %801 = vmatpush1.msra.mxu0 0.0
    %802 = vmatprep.subr.mxu0 0.0
    %803 = vmatpush1.msra.mxu0 0.0
    %804 = vmatprep.subr.mxu0 0.0
    %805 = vmatpush1.msra.mxu0 0.0
    %806 = vmatprep.subr.mxu0 0.0
    %807 = vmatpush1.msra.mxu0 0.0
    %808 = vmatprep.subr.mxu0 0.0
    %809 = vmatpush1.msra.mxu0 0.0
    %810 = vmatprep.subr.mxu0 0.0
    %811 = vmatpush1.msra.mxu0 0.0
    %812 = vmatprep.subr.mxu0 0.0
    %813 = vmatpush1.msra.mxu0 0.0
    %814 = vmatprep.subr.mxu0 0.0
    %815 = vmatpush1.msra.mxu0 0.0
    %816 = vmatprep.subr.mxu0 0.0
    %817 = vmatpush1.msra.mxu0 0.0
    %818 = vmatprep.subr.mxu0 0.0
    %819 = vmatpush1.msra.mxu0 %v786
    %820 = vmatprep.subr.mxu0 0.0
    %821 = vmatpush2.msra.mxu0 0.0
    %822 = vmatprep.subr.mxu0 0.0
    %823 = vmatpush2.msra.mxu0 0.0
    %824 = vmatprep.subr.mxu0 0.0
    %825 = vmatpush2.msra.mxu0 0.0
    %826 = vmatprep.subr.mxu0 0.0
    %827 = vmatpush2.msra.mxu0 0.0
    %828 = vmatprep.subr.mxu0 0.0
    %829 = vmatpush2.msra.mxu0 0.0
    %830 = vmatprep.subr.mxu0 0.0
    %831 = vmatpush2.msra.mxu0 0.0
    %832 = vmatprep.subr.mxu0 0.0
    %833 = vmatpush2.msra.mxu0 0.0
    %834 = vmatprep.subr.mxu0 0.0
    %835 = vmatpush2.msra.mxu0 0.0
    %836 = vmatprep.subr.mxu0 0.0
    %837 = vmatpush2.msra.mxu0 0.0
    %838 = vmatprep.subr.mxu0 0.0
    %839 = vmatpush2.msra.mxu0 0.0
    %840 = vmatprep.subr.mxu0 0.0
    %841 = vmatpush2.msra.mxu0 0.0
    %842 = vmatprep.subr.mxu0 0.0
    %843 = vmatpush2.msra.mxu0 0.0
    %844 = vmatprep.subr.mxu0 0.0
    %845 = vmatpush2.msra.mxu0 0.0
    %846 = vmatprep.subr.mxu0 0.0
    %847 = vmatpush2.msra.mxu0 0.0
    %848 = vmatprep.subr.mxu0 0.0
    %849 = vmatpush2.msra.mxu0 0.0
    %850 = vmatprep.subr.mxu0 0.0
    %851 = vmatpush2.msra.mxu0 0.0
    %852 = vmatprep.mubr.f32.mxu0 0.0
    %853 = vmatmul.mubr.f32.gmra.mxu0 %v783
    %v854 = vpop.f32.mrf.mxu0
    %v855 = vadd.f32 %v765, %v854
    %v856 = vpop.f32.mrf.mxu0
    %857 = vdwg.mxu0
    %v858 = vld [vmem:[%s8] sm:$0xff]
    %v859 = vld [vmem:[%s8 + $0x8] sm:$0xff]
    %v860 = vld [vmem:[%s8 + $0x10] sm:$0xff]
    %v861 = vld [vmem:[%s8 + $0x18] sm:$0xff]
    %v862 = vld [vmem:[%s8 + $0x20] sm:$0xff]
    %v863 = vld [vmem:[%s8 + $0x28] sm:$0xff]
    %v864 = vld [vmem:[%s8 + $0x30] sm:$0xff]
    %v865 = vld [vmem:[%s8 + $0x38] sm:$0xff]
    %v867 = vsel %vm549, %v665, 0
    %869 = vmatprep.subr.mxu0 0.0
    %870 = vmatpush1.msra.mxu0 0.0
    %871 = vmatprep.subr.mxu0 0.0
    %872 = vmatpush1.msra.mxu0 0.0
    %873 = vmatprep.subr.mxu0 0.0
    %874 = vmatpush1.msra.mxu0 0.0
    %875 = vmatprep.subr.mxu0 0.0
    %876 = vmatpush1.msra.mxu0 0.0
    %877 = vmatprep.subr.mxu0 0.0
    %878 = vmatpush1.msra.mxu0 0.0
    %879 = vmatprep.subr.mxu0 0.0
    %880 = vmatpush1.msra.mxu0 0.0
    %881 = vmatprep.subr.mxu0 0.0
    %882 = vmatpush1.msra.mxu0 0.0
    %883 = vmatprep.subr.mxu0 0.0
    %884 = vmatpush1.msra.mxu0 0.0
    %885 = vmatprep.subr.mxu0 0.0
    %886 = vmatpush1.msra.mxu0 %v865
    %887 = vmatprep.subr.mxu0 0.0
    %888 = vmatpush1.msra.mxu0 %v864
    %889 = vmatprep.subr.mxu0 0.0
    %890 = vmatpush1.msra.mxu0 %v863
    %891 = vmatprep.subr.mxu0 0.0
    %892 = vmatpush1.msra.mxu0 %v862
    %893 = vmatprep.subr.mxu0 0.0
    %894 = vmatpush1.msra.mxu0 %v861
    %895 = vmatprep.subr.mxu0 0.0
    %896 = vmatpush1.msra.mxu0 %v860
    %897 = vmatprep.subr.mxu0 0.0
    %898 = vmatpush1.msra.mxu0 %v859
    %899 = vmatprep.subr.mxu0 0.0
    %900 = vmatpush1.msra.mxu0 %v858
    %901 = vmatprep.subr.mxu0 0.0
    %902 = vmatpush2.msra.mxu0 0.0
    %903 = vmatprep.subr.mxu0 0.0
    %904 = vmatpush2.msra.mxu0 0.0
    %905 = vmatprep.subr.mxu0 0.0
    %906 = vmatpush2.msra.mxu0 0.0
    %907 = vmatprep.subr.mxu0 0.0
    %908 = vmatpush2.msra.mxu0 0.0
    %909 = vmatprep.subr.mxu0 0.0
    %910 = vmatpush2.msra.mxu0 0.0
    %911 = vmatprep.subr.mxu0 0.0
    %912 = vmatpush2.msra.mxu0 0.0
    %913 = vmatprep.subr.mxu0 0.0
    %914 = vmatpush2.msra.mxu0 0.0
    %915 = vmatprep.subr.mxu0 0.0
    %916 = vmatpush2.msra.mxu0 0.0
    %917 = vmatprep.subr.mxu0 0.0
    %918 = vmatpush2.msra.mxu0 0.0
    %919 = vmatprep.subr.mxu0 0.0
    %920 = vmatpush2.msra.mxu0 0.0
    %921 = vmatprep.subr.mxu0 0.0
    %922 = vmatpush2.msra.mxu0 0.0
    %923 = vmatprep.subr.mxu0 0.0
    %924 = vmatpush2.msra.mxu0 0.0
    %925 = vmatprep.subr.mxu0 0.0
    %926 = vmatpush2.msra.mxu0 0.0
    %927 = vmatprep.subr.mxu0 0.0
    %928 = vmatpush2.msra.mxu0 0.0
    %929 = vmatprep.subr.mxu0 0.0
    %930 = vmatpush2.msra.mxu0 0.0
    %931 = vmatprep.subr.mxu0 0.0
    %932 = vmatpush2.msra.mxu0 0.0
    %933 = vmatprep.mubr.f32.mxu0 0.0
    %934 = vmatmul.mubr.f32.gmra.mxu0 %v867
    %v935 = vpop.f32.mrf.mxu0
    %v936 = vadd.f32 0.0, %v935
    %v937 = vpop.f32.mrf.mxu0
    %938 = vdwg.mxu0
    %v939 = vadd.f32 %v855, %v936
    %v940 = vld [vmem:[%s9] sm:$0x1]
    %v942 = vlaneseq
    %v943 = vshrl.u32 %v942, 7
    %v944 = vsub.s32 0, %v943
    %v945 = vrot.slane %v940, %v944
    %v947 = vadd.f32 %v939, %v945
    %v948 = vmax.f32 %v947, 0.0
    %949 = vst.msk [vmem:[#allocation2] sm:$0xff] %vm48, %v948
    // Predicated region
    $region42: #{tpu_custom_call.1} parent=1 // pred_check
      _
    $region43: #{tpu_custom_call.1} parent=1 // pred_check_branch
      %951 = sbr.rel (0) target = $region45
    $region44: #{tpu_custom_call.1} parent=1 // pred_region
      %s953 = ssub.s32 128, 128
      %954 = vsyncadd [#allocation3], %s953
      %s956 = sshll.u32 [#allocation2], 4
      %s957 = int_to_ptr.vmem [resolvable:$true] %s956
      %959 = dma.vmem_to_hbm [thread:$0]  %s957, 128, %s10, [#allocation3]
    $region45: #{tpu_custom_call.1} parent=1 // pred_fallthru
      _
    // Predicated region
    $region46: #{tpu_custom_call.1} parent=1 // pred_check
      _
    $region47: #{tpu_custom_call.1} parent=1 // pred_check_branch
      %961 = sbr.rel (0) target = $region49
    $region48: #{tpu_custom_call.1} parent=1 // pred_region
      %962 = dma.done [#allocation3], 128
    $region49: #{tpu_custom_call.1} parent=1 // pred_fallthru
      _
    %963 = vsyncpa [#allocation3], 1

</llo_original>
